<compile_context>
chip_gen: v7x
topology: tpu7x:2x2x1
jax: 0.10.0
libtpu: 0.0.40
codegen_flags: <defaults>
</compile_context>

<pallas_src>
import functools

import jax
import jax.numpy as jnp
from jax.experimental import pallas as pl
from jax.experimental.pallas import tpu as pltpu

HIDDEN = 256
LANE = 128


def _round_up(n, m):
    return ((n + m - 1) // m) * m


def _default_act_dtype():
    """bf16 bias+ReLU on chips with a bf16 VPU (v6e/v7x); f32 on v5e/older."""
    try:
        kind = jax.devices()[0].device_kind.lower()
    except Exception:
        return jnp.float32
    if any(f"v{g}" in kind for g in (2, 3, 4, 5)):
        return jnp.float32
    return jnp.bfloat16


def policy_mlp_kernel(x_ref, w1_ref, b1_ref, w2_ref, b2_ref, w3_ref, b3_ref,
                      o_ref, *, act_dtype):
    # Three MXU matmuls (bf16 in, f32 accumulate).  Bias + ReLU run in
    # `act_dtype` (bf16 on v6e/v7x, f32 on v5e); the next matmul's LHS is bf16.
    x = x_ref[...].astype(jnp.bfloat16)

    h1 = jnp.dot(x, w1_ref[...], preferred_element_type=jnp.float32)
    h1 = jnp.maximum(h1.astype(act_dtype) + b1_ref[...].astype(act_dtype), 0.0)
    h1 = h1.astype(jnp.bfloat16)                                   # relu(fc1)

    h2 = jnp.dot(h1, w2_ref[...], preferred_element_type=jnp.float32)
    h2 = jnp.maximum(h2.astype(act_dtype) + b2_ref[...].astype(act_dtype), 0.0)
    h2 = h2.astype(jnp.bfloat16)                                   # relu(fc2)

    out = jnp.dot(h2, w3_ref[...], preferred_element_type=jnp.float32)
    o_ref[...] = (out + b3_ref[...]).astype(o_ref.dtype)           # fc3 logits


@functools.partial(jax.jit,
                   static_argnames=("action_dim", "tile_m", "act_dtype"))
def policy_network_forward(x, params, *, action_dim, tile_m=1024,
                           act_dtype=None):
    """x: [B, state_dim] f32; params from init_policy_params. Returns [B, action_dim] f32."""
    if act_dtype is None:
        act_dtype = _default_act_dtype()

    w1, b1 = params["w1"], params["b1"]
    w2, b2 = params["w2"], params["b2"]
    w3, b3 = params["w3"], params["b3"]          # w3/b3 lane-padded to 128 cols

    B, state_dim = x.shape
    out_pad = w3.shape[1]                        # 128 (lane-dense output slab)

    # --- Adaptive batch tiling --------------------------------------------
    # Choose the number of grid steps first, then the tile size, so that tail
    # padding is at most ~8 rows per step (instead of up to a whole tile) and
    # there are >= 2 steps whenever possible (megacore occupancy on v7x).
    b8 = _round_up(B, 8)
    n_steps = max(pl.cdiv(b8, tile_m), 2 if b8 >= 16 else 1)
    tm = _round_up(pl.cdiv(b8, n_steps), 8)
    b_pad = tm * n_steps
    if b_pad != B:
        x = jnp.pad(x, ((0, b_pad - B), (0, 0)))
    grid = (n_steps,)

    # Weights/biases: full-array blocks, constant index_map -> stay resident
    # in VMEM across all batch tiles (no re-DMA per grid step).
    const = lambda a: pl.BlockSpec(a.shape, lambda i: (0, 0))

    # Advisory cost estimate so XLA schedules surrounding pad/slice ops well.
    flops = 2 * b_pad * (state_dim * HIDDEN + HIDDEN * HIDDEN + HIDDEN * out_pad)
    bytes_accessed = (
        x.size * x.dtype.itemsize
        + sum(int(a.size) * a.dtype.itemsize for a in (w1, b1, w2, b2, w3, b3))
        + b_pad * out_pad * 4)
    cost = pl.CostEstimate(flops=flops, transcendentals=0,
                           bytes_accessed=bytes_accessed)

    out = pl.pallas_call(
        functools.partial(policy_mlp_kernel, act_dtype=act_dtype),
        out_shape=jax.ShapeDtypeStruct((b_pad, out_pad), jnp.float32),
        grid_spec=pltpu.PrefetchScalarGridSpec(
            num_scalar_prefetch=0,
            grid=grid,
            in_specs=[
                pl.BlockSpec((tm, state_dim), lambda i: (i, 0)),   # x tile
                const(w1), const(b1),
                const(w2), const(b2),
                const(w3), const(b3),
            ],
            out_specs=pl.BlockSpec((tm, out_pad), lambda i: (i, 0)),
        ),
        compiler_params=pltpu.CompilerParams(
            dimension_semantics=("parallel",)),    # batch rows are independent
        cost_estimate=cost,
    )(x, w1, b1, w2, b2, w3, b3)

    return out[:B, :action_dim]


def init_policy_params(key, state_dim, action_dim, hidden=HIDDEN):
    """Init matching nn.Linear's U(-1/sqrt(fan_in), 1/sqrt(fan_in)).

    Weights stored (in, out) in bf16 (halves weight DMA; MXU-native).
    Biases f32 (cast in-kernel to the chip's elementwise dtype).  fc3
    weight/bias are zero-padded to 128 output columns so the kernel's final
    store is lane-dense.
    """
    def linear(key, fan_in, fan_out):
        kw, kb = jax.random.split(key)
        bound = 1.0 / jnp.sqrt(fan_in)
        w = jax.random.uniform(kw, (fan_in, fan_out), jnp.float32, -bound, bound)
        b = jax.random.uniform(kb, (1, fan_out), jnp.float32, -bound, bound)
        return w, b

    k1, k2, k3 = jax.random.split(key, 3)
    w1, b1 = linear(k1, state_dim, hidden)
    w2, b2 = linear(k2, hidden, hidden)
    w3, b3 = linear(k3, hidden, action_dim)

    out_pad = _round_up(action_dim, LANE)
    w3 = jnp.pad(w3, ((0, 0), (0, out_pad - action_dim)))
    b3 = jnp.pad(b3, ((0, 0), (0, out_pad - action_dim)))

    return {
        "w1": w1.astype(jnp.bfloat16), "b1": b1,
        "w2": w2.astype(jnp.bfloat16), "b2": b2,
        "w3": w3.astype(jnp.bfloat16), "b3": b3,
    }


def reference_forward(x, p, action_dim, act_dtype):
    """Pure-JAX reference using the identical mixed-precision recipe."""
    h1 = jnp.dot(x.astype(jnp.bfloat16), p["w1"],
                 preferred_element_type=jnp.float32)
    h1 = jnp.maximum(h1.astype(act_dtype) + p["b1"].astype(act_dtype), 0.0)
    h2 = jnp.dot(h1.astype(jnp.bfloat16), p["w2"],
                 preferred_element_type=jnp.float32)
    h2 = jnp.maximum(h2.astype(act_dtype) + p["b2"].astype(act_dtype), 0.0)
    out = jnp.dot(h2.astype(jnp.bfloat16), p["w3"],
                  preferred_element_type=jnp.float32) + p["b3"]
    return out[:, :action_dim]


if __name__ == "__main__":
    key = jax.random.PRNGKey(0)
    k_param, k_x = jax.random.split(key)

    batch, state_dim, action_dim = 8, 16, 8
    params = init_policy_params(k_param, state_dim, action_dim)
    x = jax.random.normal(k_x, (batch, state_dim), jnp.float32)

    logits = policy_network_forward(x, params, action_dim=action_dim)
    jax.block_until_ready(logits)

    act_dtype = _default_act_dtype()
    ref = reference_forward(x, params, action_dim, act_dtype)
    assert logits.shape == (batch, action_dim)
    assert jnp.allclose(logits, ref, atol=2e-2, rtol=2e-2), (
        float(jnp.max(jnp.abs(logits - ref))))

    # TODO(synk): PolicyNetwork.sample (softmax + Categorical sampling +
    # log_prob) is left to the JAX wrapper / a follow-up fused kernel.
    print("KERNEL_OK")
</pallas_src>

<mosaic_0001>
module attributes {stable_mosaic.version = 11 : i64} {
  func.func @policy_mlp_kernel(%arg0: i32, %arg1: memref<8x16xf32, #tpu.memory_space<vmem>>, %arg2: memref<16x256xbf16, #tpu.memory_space<vmem>>, %arg3: memref<1x256xf32, #tpu.memory_space<vmem>>, %arg4: memref<256x256xbf16, #tpu.memory_space<vmem>>, %arg5: memref<1x256xf32, #tpu.memory_space<vmem>>, %arg6: memref<256x128xbf16, #tpu.memory_space<vmem>>, %arg7: memref<1x128xf32, #tpu.memory_space<vmem>>, %arg8: memref<8x128xf32, #tpu.memory_space<vmem>>) attributes {dimension_semantics = [#tpu.dimension_semantics<parallel>], iteration_bounds = array<i64: 1>, scalar_prefetch = 0 : i64, scratch_operands = 0 : i64, tpu.core_type = #tpu.core_type<tc>, window_params = [{transform_indices = @transform_0, window_bounds = array<i64: 8, 16>}, {pipeline_mode = #tpu.pipeline_mode<synchronous>, transform_indices = @transform_1, window_bounds = array<i64: 16, 256>}, {pipeline_mode = #tpu.pipeline_mode<synchronous>, transform_indices = @transform_2, window_bounds = array<i64: 1, 256>}, {pipeline_mode = #tpu.pipeline_mode<synchronous>, transform_indices = @transform_3, window_bounds = array<i64: 256, 256>}, {pipeline_mode = #tpu.pipeline_mode<synchronous>, transform_indices = @transform_4, window_bounds = array<i64: 1, 256>}, {pipeline_mode = #tpu.pipeline_mode<synchronous>, transform_indices = @transform_5, window_bounds = array<i64: 256, 128>}, {pipeline_mode = #tpu.pipeline_mode<synchronous>, transform_indices = @transform_6, window_bounds = array<i64: 1, 128>}, {transform_indices = @transform_7, window_bounds = array<i64: 8, 128>}]} {
    %c0 = arith.constant 0 : index
    %c0_0 = arith.constant 0 : index
    %0 = vector.load %arg1[%c0, %c0_0] : memref<8x16xf32, #tpu.memory_space<vmem>>, vector<8x16xf32>
    %1 = arith.truncf %0 : vector<8x16xf32> to vector<8x16xbf16>
    %c0_1 = arith.constant 0 : index
    %c0_2 = arith.constant 0 : index
    %2 = vector.load %arg2[%c0_1, %c0_2] : memref<16x256xbf16, #tpu.memory_space<vmem>>, vector<16x256xbf16>
    %cst = arith.constant dense<0.000000e+00> : vector<8x256xf32>
    %3 = tpu.matmul %1, %2, %cst {dimension_numbers = #tpu.dot_dimension_numbers<[1], [0], [0], [1], [0, 0, 1, 1], [], []>} : vector<8x16xbf16>, vector<16x256xbf16>, vector<8x256xf32> -> vector<8x256xf32>
    %4 = arith.truncf %3 : vector<8x256xf32> to vector<8x256xbf16>
    %c0_3 = arith.constant 0 : index
    %c0_4 = arith.constant 0 : index
    %5 = vector.load %arg3[%c0_3, %c0_4] : memref<1x256xf32, #tpu.memory_space<vmem>>, vector<1x256xf32>
    %6 = arith.truncf %5 : vector<1x256xf32> to vector<1x256xbf16>
    %7 = vector.broadcast %6 : vector<1x256xbf16> to vector<8x256xbf16>
    %8 = arith.addf %4, %7 : vector<8x256xbf16>
    %cst_5 = arith.constant 0.000000e+00 : bf16
    %9 = vector.broadcast %cst_5 : bf16 to vector<8x256xbf16>
    %10 = arith.maximumf %8, %9 : vector<8x256xbf16>
    %c0_6 = arith.constant 0 : index
    %c0_7 = arith.constant 0 : index
    %11 = vector.load %arg4[%c0_6, %c0_7] : memref<256x256xbf16, #tpu.memory_space<vmem>>, vector<256x256xbf16>
    %cst_8 = arith.constant dense<0.000000e+00> : vector<8x256xf32>
    %12 = tpu.matmul %10, %11, %cst_8 {dimension_numbers = #tpu.dot_dimension_numbers<[1], [0], [0], [1], [0, 0, 1, 1], [], []>} : vector<8x256xbf16>, vector<256x256xbf16>, vector<8x256xf32> -> vector<8x256xf32>
    %13 = arith.truncf %12 : vector<8x256xf32> to vector<8x256xbf16>
    %c0_9 = arith.constant 0 : index
    %c0_10 = arith.constant 0 : index
    %14 = vector.load %arg5[%c0_9, %c0_10] : memref<1x256xf32, #tpu.memory_space<vmem>>, vector<1x256xf32>
    %15 = arith.truncf %14 : vector<1x256xf32> to vector<1x256xbf16>
    %16 = vector.broadcast %15 : vector<1x256xbf16> to vector<8x256xbf16>
    %17 = arith.addf %13, %16 : vector<8x256xbf16>
    %cst_11 = arith.constant 0.000000e+00 : bf16
    %18 = vector.broadcast %cst_11 : bf16 to vector<8x256xbf16>
    %19 = arith.maximumf %17, %18 : vector<8x256xbf16>
    %c0_12 = arith.constant 0 : index
    %c0_13 = arith.constant 0 : index
    %20 = vector.load %arg6[%c0_12, %c0_13] : memref<256x128xbf16, #tpu.memory_space<vmem>>, vector<256x128xbf16>
    %cst_14 = arith.constant dense<0.000000e+00> : vector<8x128xf32>
    %21 = tpu.matmul %19, %20, %cst_14 {dimension_numbers = #tpu.dot_dimension_numbers<[1], [0], [0], [1], [0, 0, 1, 1], [], []>} : vector<8x256xbf16>, vector<256x128xbf16>, vector<8x128xf32> -> vector<8x128xf32>
    %c0_15 = arith.constant 0 : index
    %c0_16 = arith.constant 0 : index
    %22 = vector.load %arg7[%c0_15, %c0_16] : memref<1x128xf32, #tpu.memory_space<vmem>>, vector<1x128xf32>
    %23 = vector.broadcast %22 : vector<1x128xf32> to vector<8x128xf32>
    %24 = arith.addf %21, %23 : vector<8x128xf32>
    %c0_17 = arith.constant 0 : index
    %c0_18 = arith.constant 0 : index
    %25 = vector.load %arg8[%c0_17, %c0_18] : memref<8x128xf32, #tpu.memory_space<vmem>>, vector<8x128xf32>
    tpu.vector_store %arg8[%c0_17, %c0_18], %24 {strides = array<i32>} : memref<8x128xf32, #tpu.memory_space<vmem>>, vector<8x128xf32>,
    return
  }
  func.func @transform_0(%arg0: i32) -> (i32, i32) {
    %c0_i32 = arith.constant 0 : i32
    %c0_i32_0 = arith.constant 0 : i32
    return %arg0, %c0_i32 : i32, i32
  }
  func.func @transform_1(%arg0: i32) -> (i32, i32) {
    %c0_i32 = arith.constant 0 : i32
    %c0_i32_0 = arith.constant 0 : i32
    %c0_i32_1 = arith.constant 0 : i32
    return %c0_i32, %c0_i32_0 : i32, i32
  }
  func.func @transform_2(%arg0: i32) -> (i32, i32) {
    %c0_i32 = arith.constant 0 : i32
    %c0_i32_0 = arith.constant 0 : i32
    %c0_i32_1 = arith.constant 0 : i32
    return %c0_i32, %c0_i32_0 : i32, i32
  }
  func.func @transform_3(%arg0: i32) -> (i32, i32) {
    %c0_i32 = arith.constant 0 : i32
    %c0_i32_0 = arith.constant 0 : i32
    %c0_i32_1 = arith.constant 0 : i32
    return %c0_i32, %c0_i32_0 : i32, i32
  }
  func.func @transform_4(%arg0: i32) -> (i32, i32) {
    %c0_i32 = arith.constant 0 : i32
    %c0_i32_0 = arith.constant 0 : i32
    %c0_i32_1 = arith.constant 0 : i32
    return %c0_i32, %c0_i32_0 : i32, i32
  }
  func.func @transform_5(%arg0: i32) -> (i32, i32) {
    %c0_i32 = arith.constant 0 : i32
    %c0_i32_0 = arith.constant 0 : i32
    %c0_i32_1 = arith.constant 0 : i32
    return %c0_i32, %c0_i32_0 : i32, i32
  }
  func.func @transform_6(%arg0: i32) -> (i32, i32) {
    %c0_i32 = arith.constant 0 : i32
    %c0_i32_0 = arith.constant 0 : i32
    %c0_i32_1 = arith.constant 0 : i32
    return %c0_i32, %c0_i32_0 : i32, i32
  }
  func.func @transform_7(%arg0: i32) -> (i32, i32) {
    %c0_i32 = arith.constant 0 : i32
    %c0_i32_0 = arith.constant 0 : i32
    return %arg0, %c0_i32 : i32, i32
  }
}

</mosaic_0001>

<llo_original>
// kernel: policy_network_forward.1
$region0: #{policy_network_forward.1}
  #allocation0 [shape = 'u32[]', space=smem, size = 0x4, offset = 0x4, fixed_abs, tag = 'smem constant byte address 0x4 - core index']
  #allocation1 [shape = 'u32[144,128]{1,0:T(1,128)}', space=vmem, size = 0x12000, scoped, tag = 'internal scratch']
  %s0 = inlined_call_operand.hbm [shape: f32[8,16], index: 0, kind: input, shape index: {}]
  %s1 = inlined_call_operand.hbm [shape: bf16[16,256], index: 1, kind: input, shape index: {}]
  %s2 = inlined_call_operand.vmem [shape: f32[1,256], index: 2, kind: input, shape index: {}]
  %s3 = inlined_call_operand.hbm [shape: bf16[256,256], index: 3, kind: input, shape index: {}]
  %s4 = inlined_call_operand.vmem [shape: f32[1,256], index: 4, kind: input, shape index: {}]
  %s5 = inlined_call_operand.hbm [shape: bf16[256,128], index: 5, kind: input, shape index: {}]
  %s6 = inlined_call_operand.vmem [shape: f32[1,128], index: 6, kind: input, shape index: {}]
  %s7 = inlined_call_operand.hbm [shape: f32[8,128], index: 7, kind: output, shape index: {}]
  %s8 = sld [smem:[#allocation0]]
  $region54: #{policy_network_forward.1} parent=0
    _
  %s10 = ssub.s32 1, %s8
  %s11 = scalar_select 0, %s10, %s8
  $region1: #{policy_network_forward.1} parent=0
    #allocation2 [shape = 'u8[4096]{0}', space=vmem, size = 0x1000, scoped, tag = 'input window, operand 0, single buffered']
    #allocation3 [shape = 's32[1]{0}', space=sflag, size = 0x4, scoped, tag = 'scoped memory for policy_network_forward.1']
    #allocation4 [shape = 's32[1]{0}', space=sflag, size = 0x4, scoped, tag = 'scoped memory for policy_network_forward.1']
    #allocation5 [shape = 'u8[8192]{0}', space=vmem, size = 0x2000, scoped, tag = 'input window, operand 1, single buffered']
    #allocation6 [shape = 's32[1]{0}', space=sflag, size = 0x4, scoped, tag = 'scoped memory for policy_network_forward.1']
    #allocation7 [shape = 'u8[131072]{0}', space=vmem, size = 0x20000, scoped, tag = 'input window, operand 3, single buffered']
    #allocation8 [shape = 'u8[65536]{0}', space=vmem, size = 0x10000, scoped, tag = 'input window, operand 5, single buffered']
    #allocation9 [shape = 's32[1]{0}', space=sflag, size = 0x4, scoped, tag = 'scoped memory for policy_network_forward.1']
    #allocation10 [shape = 'u8[4096]{0}', space=vmem, size = 0x1000, scoped, tag = 'output window, operand 0, single buffered']
    %12 = vsyncpa [#allocation3], 0
    %13 = vsyncpa [#allocation6], 0
    %14 = vsyncpa [#allocation9], 0
    %15 = vsyncpa [#allocation4], 0
    // Predicated region
    $region2: #{policy_network_forward.1} parent=1 // pred_check
      _
    $region3: #{policy_network_forward.1} parent=1 // pred_check_branch
      %17 = sbr.rel (0) target = $region5
    $region4: #{policy_network_forward.1} parent=1 // pred_region
      %s19 = ssub.s32 128, 128
      %20 = vsyncadd [#allocation3], %s19
      %s22 = sshll.u32 [#allocation2], 4
      %s23 = int_to_ptr.vmem [resolvable:$true] %s22
      %25 = dma.hbm_to_vmem [thread:$0]  %s0, 128, %s23, [#allocation3]
    $region5: #{policy_network_forward.1} parent=1 // pred_fallthru
      _
    // Predicated region
    $region6: #{policy_network_forward.1} parent=1 // pred_check
      _
    $region7: #{policy_network_forward.1} parent=1 // pred_check_branch
      %27 = sbr.rel (0) target = $region9
    $region8: #{policy_network_forward.1} parent=1 // pred_region
      %s29 = ssub.s32 256, 256
      %30 = vsyncadd [#allocation6], %s29
      %s31 = sshll.u32 [#allocation5], 4
      %s32 = int_to_ptr.vmem [resolvable:$true] %s31
      %37 = dma.hbm_to_vmem [thread:$0]  %s1, 256, %s32, [#allocation6], 128, 128, 8
    $region9: #{policy_network_forward.1} parent=1 // pred_fallthru
      _
    // Predicated region
    $region10: #{policy_network_forward.1} parent=1 // pred_check
      _
    $region11: #{policy_network_forward.1} parent=1 // pred_check_branch
      %39 = sbr.rel (0) target = $region13
    $region12: #{policy_network_forward.1} parent=1 // pred_region
      _
    $region13: #{policy_network_forward.1} parent=1 // pred_fallthru
      _
    // Predicated region
    $region14: #{policy_network_forward.1} parent=1 // pred_check
      _
    $region15: #{policy_network_forward.1} parent=1 // pred_check_branch
      %41 = sbr.rel (0) target = $region17
    $region16: #{policy_network_forward.1} parent=1 // pred_region
      %s43 = ssub.s32 4096, 4096
      %44 = vsyncadd [#allocation6], %s43
      %s45 = sshll.u32 [#allocation7], 4
      %s46 = int_to_ptr.vmem [resolvable:$true] %s45
      %51 = dma.hbm_to_vmem [thread:$0]  %s3, 4096, %s46, [#allocation6], 128, 128, 8
    $region17: #{policy_network_forward.1} parent=1 // pred_fallthru
      _
    // Predicated region
    $region18: #{policy_network_forward.1} parent=1 // pred_check
      _
    $region19: #{policy_network_forward.1} parent=1 // pred_check_branch
      %53 = sbr.rel (0) target = $region21
    $region20: #{policy_network_forward.1} parent=1 // pred_region
      _
    $region21: #{policy_network_forward.1} parent=1 // pred_fallthru
      _
    // Predicated region
    $region22: #{policy_network_forward.1} parent=1 // pred_check
      _
    $region23: #{policy_network_forward.1} parent=1 // pred_check_branch
      %55 = sbr.rel (0) target = $region25
    $region24: #{policy_network_forward.1} parent=1 // pred_region
      %s57 = ssub.s32 2048, 2048
      %58 = vsyncadd [#allocation9], %s57
      %s59 = sshll.u32 [#allocation8], 4
      %s60 = int_to_ptr.vmem [resolvable:$true] %s59
      %65 = dma.hbm_to_vmem [thread:$0]  %s5, 2048, %s60, [#allocation9], 64, 64, 4
    $region25: #{policy_network_forward.1} parent=1 // pred_fallthru
      _
    // Predicated region
    $region26: #{policy_network_forward.1} parent=1 // pred_check
      _
    $region27: #{policy_network_forward.1} parent=1 // pred_check_branch
      %67 = sbr.rel (0) target = $region29
    $region28: #{policy_network_forward.1} parent=1 // pred_region
      _
    $region29: #{policy_network_forward.1} parent=1 // pred_fallthru
      _
    // Predicated region
    $region30: #{policy_network_forward.1} parent=1 // pred_check
      _
    $region31: #{policy_network_forward.1} parent=1 // pred_check_branch
      %69 = sbr.rel (0) target = $region33
    $region32: #{policy_network_forward.1} parent=1 // pred_region
      %70 = dma.done [#allocation3], 128
    $region33: #{policy_network_forward.1} parent=1 // pred_fallthru
      _
    // Predicated region
    $region34: #{policy_network_forward.1} parent=1 // pred_check
      _
    $region35: #{policy_network_forward.1} parent=1 // pred_check_branch
      %72 = sbr.rel (0) target = $region37
    $region36: #{policy_network_forward.1} parent=1 // pred_region
      %73 = dma.done [#allocation6], 256
    $region37: #{policy_network_forward.1} parent=1 // pred_fallthru
      _
    // Predicated region
    $region38: #{policy_network_forward.1} parent=1 // pred_check
      _
    $region39: #{policy_network_forward.1} parent=1 // pred_check_branch
      %75 = sbr.rel (0) target = $region41
    $region40: #{policy_network_forward.1} parent=1 // pred_region
      %76 = dma.done [#allocation6], 4096
    $region41: #{policy_network_forward.1} parent=1 // pred_fallthru
      _
    // Predicated region
    $region42: #{policy_network_forward.1} parent=1 // pred_check
      _
    $region43: #{policy_network_forward.1} parent=1 // pred_check_branch
      %78 = sbr.rel (0) target = $region45
    $region44: #{policy_network_forward.1} parent=1 // pred_region
      %79 = dma.done [#allocation9], 2048
    $region45: #{policy_network_forward.1} parent=1 // pred_fallthru
      _
    %v81 = vld [vmem:[#allocation2] sm:$0xff]
    %v82 = vpack.c.bf16 %v81, %v81
    %v83 = vld [vmem:[#allocation5] sm:$0xff]
    %v84 = vld [vmem:[#allocation5 + $0x8] sm:$0xff]
    %v87 = vunpack.c.l.b16 %v83
    %v88 = vunpack.c.h.b16 %v83
    %v89 = vunpack.c.l.b16 %v84
    %v90 = vunpack.c.h.b16 %v84
    %v91 = vpack.c.b16 %v89, %v87
    %v92 = vpack.c.b16 %v90, %v88
    %vm95 = vcmask 130048
    %v97 = vsel %vm95, %v82, 0
    %99 = vmatprep.subr.bf16.mxu0 %v92
    %100 = vmatpush1.bf16.msra.mxu0 %v91
    %101 = vmatprep.subr.bf16.mxu0 0
    %102 = vmatpush1.bf16.msra.mxu0 0
    %103 = vmatprep.subr.bf16.mxu0 0
    %104 = vmatpush1.bf16.msra.mxu0 0
    %105 = vmatprep.subr.bf16.mxu0 0
    %106 = vmatpush1.bf16.msra.mxu0 0
    %107 = vmatprep.subr.bf16.mxu0 0
    %108 = vmatpush1.bf16.msra.mxu0 0
    %109 = vmatprep.subr.bf16.mxu0 0
    %110 = vmatpush1.bf16.msra.mxu0 0
    %111 = vmatprep.subr.bf16.mxu0 0
    %112 = vmatpush1.bf16.msra.mxu0 0
    %113 = vmatprep.subr.bf16.mxu0 0
    %114 = vmatpush1.bf16.msra.mxu0 0
    %115 = vmatprep.subr.bf16.mxu0 0
    %116 = vmatpush1.bf16.msra.mxu0 0
    %117 = vmatprep.subr.bf16.mxu0 0
    %118 = vmatpush1.bf16.msra.mxu0 0
    %119 = vmatprep.subr.bf16.mxu0 0
    %120 = vmatpush1.bf16.msra.mxu0 0
    %121 = vmatprep.subr.bf16.mxu0 0
    %122 = vmatpush1.bf16.msra.mxu0 0
    %123 = vmatprep.subr.bf16.mxu0 0
    %124 = vmatpush1.bf16.msra.mxu0 0
    %125 = vmatprep.subr.bf16.mxu0 0
    %126 = vmatpush1.bf16.msra.mxu0 0
    %127 = vmatprep.subr.bf16.mxu0 0
    %128 = vmatpush1.bf16.msra.mxu0 0
    %129 = vmatprep.subr.bf16.mxu0 0
    %130 = vmatpush1.bf16.msra.mxu0 0
    %131 = vmatprep.mubr.bf16.mxu0 0
    %132 = vmatmul.mubr.bf16.gmra.mrb[0].mxu0 %v97
    %v133 = vpop.f32.mrb[0].mxu0
    %v134 = vadd.f32 0.0, %v133
    %v135 = vpop.f32.mrb[0].mxu0
    %v136 = vadd.f32 0.0, %v135
    %v137 = vpop.f32.mrb[0].mxu0
    %v138 = vpop.f32.mrb[0].mxu0
    %139 = vdwg.mxu0
    %v140 = vpack.c.bf16 %v134, %v134
    %v141 = vpack.c.bf16 %v136, %v136
    %v142 = vld [vmem:[%s2] sm:$0x3]
    %v144 = vlaneseq
    %v145 = vshrl.u32 %v144, 7
    %v146 = vsub.s32 0, %v145
    %v147 = vrot.slane %v142, %v146
    %v148 = vlaneseq
    %v149 = vshrl.u32 %v148, 7
    %v150 = vsub.s32 1, %v149
    %v151 = vrot.slane %v142, %v150
    %v154 = vpack.c.bf16 %v147, %v147
    %v155 = vpack.c.bf16 %v151, %v151
    %v157 = vpack.i.b16 %v154, %v154
    %v159 = vlaneseq
    %v160 = vshrl.u32 %v159, 7
    %v161 = vsub.s32 0, %v160
    %v162 = vrot.slane %v157, %v161
    %v164 = vpack.i.b16 %v155, %v155
    %v166 = vlaneseq
    %v167 = vshrl.u32 %v166, 7
    %v168 = vsub.s32 0, %v167
    %v169 = vrot.slane %v164, %v168
    %v170 = vadd.bf16 %v140, %v162
    %v171 = vadd.bf16 %v141, %v169
    %v172 = vmax.bf16 %v170, 0
    %v173 = vmax.bf16 %v171, 0
    %v174 = vld [vmem:[#allocation7] sm:$0xff]
    %v175 = vld [vmem:[#allocation7 + $0x8] sm:$0xff]
    %v176 = vld [vmem:[#allocation7 + $0x10] sm:$0xff]
    %v177 = vld [vmem:[#allocation7 + $0x18] sm:$0xff]
    %v178 = vld [vmem:[#allocation7 + $0x20] sm:$0xff]
    %v179 = vld [vmem:[#allocation7 + $0x28] sm:$0xff]
    %v180 = vld [vmem:[#allocation7 + $0x30] sm:$0xff]
    %v181 = vld [vmem:[#allocation7 + $0x38] sm:$0xff]
    %v182 = vld [vmem:[#allocation7 + $0x40] sm:$0xff]
    %v183 = vld [vmem:[#allocation7 + $0x48] sm:$0xff]
    %v184 = vld [vmem:[#allocation7 + $0x50] sm:$0xff]
    %v185 = vld [vmem:[#allocation7 + $0x58] sm:$0xff]
    %v186 = vld [vmem:[#allocation7 + $0x60] sm:$0xff]
    %v187 = vld [vmem:[#allocation7 + $0x68] sm:$0xff]
    %v188 = vld [vmem:[#allocation7 + $0x70] sm:$0xff]
    %v189 = vld [vmem:[#allocation7 + $0x78] sm:$0xff]
    %v190 = vld [vmem:[#allocation7 + $0x80] sm:$0xff]
    %v191 = vld [vmem:[#allocation7 + $0x88] sm:$0xff]
    %v192 = vld [vmem:[#allocation7 + $0x90] sm:$0xff]
    %v193 = vld [vmem:[#allocation7 + $0x98] sm:$0xff]
    %v194 = vld [vmem:[#allocation7 + $0xa0] sm:$0xff]
    %v195 = vld [vmem:[#allocation7 + $0xa8] sm:$0xff]
    %v196 = vld [vmem:[#allocation7 + $0xb0] sm:$0xff]
    %v197 = vld [vmem:[#allocation7 + $0xb8] sm:$0xff]
    %v198 = vld [vmem:[#allocation7 + $0xc0] sm:$0xff]
    %v199 = vld [vmem:[#allocation7 + $0xc8] sm:$0xff]
    %v200 = vld [vmem:[#allocation7 + $0xd0] sm:$0xff]
    %v201 = vld [vmem:[#allocation7 + $0xd8] sm:$0xff]
    %v202 = vld [vmem:[#allocation7 + $0xe0] sm:$0xff]
    %v203 = vld [vmem:[#allocation7 + $0xe8] sm:$0xff]
    %v204 = vld [vmem:[#allocation7 + $0xf0] sm:$0xff]
    %v205 = vld [vmem:[#allocation7 + $0xf8] sm:$0xff]
    %v238 = vunpack.c.l.b16 %v174
    %v239 = vunpack.c.h.b16 %v174
    %v240 = vunpack.c.l.b16 %v175
    %v241 = vunpack.c.h.b16 %v175
    %v242 = vunpack.c.l.b16 %v176
    %v243 = vunpack.c.h.b16 %v176
    %v244 = vunpack.c.l.b16 %v177
    %v245 = vunpack.c.h.b16 %v177
    %v246 = vunpack.c.l.b16 %v178
    %v247 = vunpack.c.h.b16 %v178
    %v248 = vunpack.c.l.b16 %v179
    %v249 = vunpack.c.h.b16 %v179
    %v250 = vunpack.c.l.b16 %v180
    %v251 = vunpack.c.h.b16 %v180
    %v252 = vunpack.c.l.b16 %v181
    %v253 = vunpack.c.h.b16 %v181
    %v254 = vunpack.c.l.b16 %v182
    %v255 = vunpack.c.h.b16 %v182
    %v256 = vunpack.c.l.b16 %v183
    %v257 = vunpack.c.h.b16 %v183
    %v258 = vunpack.c.l.b16 %v184
    %v259 = vunpack.c.h.b16 %v184
    %v260 = vunpack.c.l.b16 %v185
    %v261 = vunpack.c.h.b16 %v185
    %v262 = vunpack.c.l.b16 %v186
    %v263 = vunpack.c.h.b16 %v186
    %v264 = vunpack.c.l.b16 %v187
    %v265 = vunpack.c.h.b16 %v187
    %v266 = vunpack.c.l.b16 %v188
    %v267 = vunpack.c.h.b16 %v188
    %v268 = vunpack.c.l.b16 %v189
    %v269 = vunpack.c.h.b16 %v189
    %v270 = vunpack.c.l.b16 %v190
    %v271 = vunpack.c.h.b16 %v190
    %v272 = vunpack.c.l.b16 %v191
    %v273 = vunpack.c.h.b16 %v191
    %v274 = vunpack.c.l.b16 %v192
    %v275 = vunpack.c.h.b16 %v192
    %v276 = vunpack.c.l.b16 %v193
    %v277 = vunpack.c.h.b16 %v193
    %v278 = vunpack.c.l.b16 %v194
    %v279 = vunpack.c.h.b16 %v194
    %v280 = vunpack.c.l.b16 %v195
    %v281 = vunpack.c.h.b16 %v195
    %v282 = vunpack.c.l.b16 %v196
    %v283 = vunpack.c.h.b16 %v196
    %v284 = vunpack.c.l.b16 %v197
    %v285 = vunpack.c.h.b16 %v197
    %v286 = vunpack.c.l.b16 %v198
    %v287 = vunpack.c.h.b16 %v198
    %v288 = vunpack.c.l.b16 %v199
    %v289 = vunpack.c.h.b16 %v199
    %v290 = vunpack.c.l.b16 %v200
    %v291 = vunpack.c.h.b16 %v200
    %v292 = vunpack.c.l.b16 %v201
    %v293 = vunpack.c.h.b16 %v201
    %v294 = vunpack.c.l.b16 %v202
    %v295 = vunpack.c.h.b16 %v202
    %v296 = vunpack.c.l.b16 %v203
    %v297 = vunpack.c.h.b16 %v203
    %v298 = vunpack.c.l.b16 %v204
    %v299 = vunpack.c.h.b16 %v204
    %v300 = vunpack.c.l.b16 %v205
    %v301 = vunpack.c.h.b16 %v205
    %v302 = vpack.c.b16 %v240, %v238
    %v303 = vpack.c.b16 %v241, %v239
    %v304 = vpack.c.b16 %v244, %v242
    %v305 = vpack.c.b16 %v245, %v243
    %v306 = vpack.c.b16 %v248, %v246
    %v307 = vpack.c.b16 %v249, %v247
    %v308 = vpack.c.b16 %v252, %v250
    %v309 = vpack.c.b16 %v253, %v251
    %v310 = vpack.c.b16 %v256, %v254
    %v311 = vpack.c.b16 %v257, %v255
    %v312 = vpack.c.b16 %v260, %v258
    %v313 = vpack.c.b16 %v261, %v259
    %v314 = vpack.c.b16 %v264, %v262
    %v315 = vpack.c.b16 %v265, %v263
    %v316 = vpack.c.b16 %v268, %v266
    %v317 = vpack.c.b16 %v269, %v267
    %v318 = vpack.c.b16 %v272, %v270
    %v319 = vpack.c.b16 %v273, %v271
    %v320 = vpack.c.b16 %v276, %v274
    %v321 = vpack.c.b16 %v277, %v275
    %v322 = vpack.c.b16 %v280, %v278
    %v323 = vpack.c.b16 %v281, %v279
    %v324 = vpack.c.b16 %v284, %v282
    %v325 = vpack.c.b16 %v285, %v283
    %v326 = vpack.c.b16 %v288, %v286
    %v327 = vpack.c.b16 %v289, %v287
    %v328 = vpack.c.b16 %v292, %v290
    %v329 = vpack.c.b16 %v293, %v291
    %v330 = vpack.c.b16 %v296, %v294
    %v331 = vpack.c.b16 %v297, %v295
    %v332 = vpack.c.b16 %v300, %v298
    %v333 = vpack.c.b16 %v301, %v299
    %366 = vmatprep.subr.bf16.mxu0 %v303
    %367 = vmatpush1.bf16.msra.mxu0 %v302
    %368 = vmatprep.subr.bf16.mxu0 %v305
    %369 = vmatpush1.bf16.msra.mxu0 %v304
    %370 = vmatprep.subr.bf16.mxu0 %v307
    %371 = vmatpush1.bf16.msra.mxu0 %v306
    %372 = vmatprep.subr.bf16.mxu0 %v309
    %373 = vmatpush1.bf16.msra.mxu0 %v308
    %374 = vmatprep.subr.bf16.mxu0 %v311
    %375 = vmatpush1.bf16.msra.mxu0 %v310
    %376 = vmatprep.subr.bf16.mxu0 %v313
    %377 = vmatpush1.bf16.msra.mxu0 %v312
    %378 = vmatprep.subr.bf16.mxu0 %v315
    %379 = vmatpush1.bf16.msra.mxu0 %v314
    %380 = vmatprep.subr.bf16.mxu0 %v317
    %381 = vmatpush1.bf16.msra.mxu0 %v316
    %382 = vmatprep.subr.bf16.mxu0 %v319
    %383 = vmatpush1.bf16.msra.mxu0 %v318
    %384 = vmatprep.subr.bf16.mxu0 %v321
    %385 = vmatpush1.bf16.msra.mxu0 %v320
    %386 = vmatprep.subr.bf16.mxu0 %v323
    %387 = vmatpush1.bf16.msra.mxu0 %v322
    %388 = vmatprep.subr.bf16.mxu0 %v325
    %389 = vmatpush1.bf16.msra.mxu0 %v324
    %390 = vmatprep.subr.bf16.mxu0 %v327
    %391 = vmatpush1.bf16.msra.mxu0 %v326
    %392 = vmatprep.subr.bf16.mxu0 %v329
    %393 = vmatpush1.bf16.msra.mxu0 %v328
    %394 = vmatprep.subr.bf16.mxu0 %v331
    %395 = vmatpush1.bf16.msra.mxu0 %v330
    %396 = vmatprep.subr.bf16.mxu0 %v333
    %397 = vmatpush1.bf16.msra.mxu0 %v332
    %398 = vmatprep.mubr.bf16.mxu0 %v173
    %399 = vmatmul.mubr.bf16.gmra.mrb[0].mxu0 %v172
    %v400 = vpop.f32.mrb[0].mxu0
    %v401 = vadd.f32 0.0, %v400
    %v402 = vpop.f32.mrb[0].mxu0
    %v403 = vadd.f32 0.0, %v402
    %v404 = vpop.f32.mrb[0].mxu0
    %v405 = vpop.f32.mrb[0].mxu0
    %406 = vdwg.mxu0
    %v407 = vpack.c.bf16 %v401, %v401
    %v408 = vpack.c.bf16 %v403, %v403
    %v409 = vld [vmem:[%s4] sm:$0x3]
    %v411 = vlaneseq
    %v412 = vshrl.u32 %v411, 7
    %v413 = vsub.s32 0, %v412
    %v414 = vrot.slane %v409, %v413
    %v415 = vlaneseq
    %v416 = vshrl.u32 %v415, 7
    %v417 = vsub.s32 1, %v416
    %v418 = vrot.slane %v409, %v417
    %v421 = vpack.c.bf16 %v414, %v414
    %v422 = vpack.c.bf16 %v418, %v418
    %v424 = vpack.i.b16 %v421, %v421
    %v426 = vlaneseq
    %v427 = vshrl.u32 %v426, 7
    %v428 = vsub.s32 0, %v427
    %v429 = vrot.slane %v424, %v428
    %v431 = vpack.i.b16 %v422, %v422
    %v433 = vlaneseq
    %v434 = vshrl.u32 %v433, 7
    %v435 = vsub.s32 0, %v434
    %v436 = vrot.slane %v431, %v435
    %v437 = vadd.bf16 %v407, %v429
    %v438 = vadd.bf16 %v408, %v436
    %v439 = vmax.bf16 %v437, 0
    %v440 = vmax.bf16 %v438, 0
    %v441 = vld [vmem:[#allocation8] sm:$0xf]
    %v442 = vld [vmem:[#allocation8 + $0x4] sm:$0xf]
    %v443 = vld [vmem:[#allocation8 + $0x8] sm:$0xf]
    %v444 = vld [vmem:[#allocation8 + $0xc] sm:$0xf]
    %v445 = vld [vmem:[#allocation8 + $0x10] sm:$0xf]
    %v446 = vld [vmem:[#allocation8 + $0x14] sm:$0xf]
    %v447 = vld [vmem:[#allocation8 + $0x18] sm:$0xf]
    %v448 = vld [vmem:[#allocation8 + $0x1c] sm:$0xf]
    %v449 = vld [vmem:[#allocation8 + $0x20] sm:$0xf]
    %v450 = vld [vmem:[#allocation8 + $0x24] sm:$0xf]
    %v451 = vld [vmem:[#allocation8 + $0x28] sm:$0xf]
    %v452 = vld [vmem:[#allocation8 + $0x2c] sm:$0xf]
    %v453 = vld [vmem:[#allocation8 + $0x30] sm:$0xf]
    %v454 = vld [vmem:[#allocation8 + $0x34] sm:$0xf]
    %v455 = vld [vmem:[#allocation8 + $0x38] sm:$0xf]
    %v456 = vld [vmem:[#allocation8 + $0x3c] sm:$0xf]
    %v457 = vld [vmem:[#allocation8 + $0x40] sm:$0xf]
    %v458 = vld [vmem:[#allocation8 + $0x44] sm:$0xf]
    %v459 = vld [vmem:[#allocation8 + $0x48] sm:$0xf]
    %v460 = vld [vmem:[#allocation8 + $0x4c] sm:$0xf]
    %v461 = vld [vmem:[#allocation8 + $0x50] sm:$0xf]
    %v462 = vld [vmem:[#allocation8 + $0x54] sm:$0xf]
    %v463 = vld [vmem:[#allocation8 + $0x58] sm:$0xf]
    %v464 = vld [vmem:[#allocation8 + $0x5c] sm:$0xf]
    %v465 = vld [vmem:[#allocation8 + $0x60] sm:$0xf]
    %v466 = vld [vmem:[#allocation8 + $0x64] sm:$0xf]
    %v467 = vld [vmem:[#allocation8 + $0x68] sm:$0xf]
    %v468 = vld [vmem:[#allocation8 + $0x6c] sm:$0xf]
    %v469 = vld [vmem:[#allocation8 + $0x70] sm:$0xf]
    %v470 = vld [vmem:[#allocation8 + $0x74] sm:$0xf]
    %v471 = vld [vmem:[#allocation8 + $0x78] sm:$0xf]
    %v472 = vld [vmem:[#allocation8 + $0x7c] sm:$0xf]
    %v473 = vld [vmem:[%s6] sm:$0x1]
    %v475 = vlaneseq
    %v476 = vshrl.u32 %v475, 7
    %v477 = vsub.s32 0, %v476
    %v478 = vrot.slane %v473, %v477
    %v512 = vunpack.c.l.b16 %v441
    %v513 = vunpack.c.l.b16 %v442
    %v514 = vunpack.c.l.b16 %v443
    %v515 = vunpack.c.l.b16 %v444
    %v516 = vunpack.c.l.b16 %v445
    %v517 = vunpack.c.l.b16 %v446
    %v518 = vunpack.c.l.b16 %v447
    %v519 = vunpack.c.l.b16 %v448
    %v520 = vunpack.c.l.b16 %v449
    %v521 = vunpack.c.l.b16 %v450
    %v522 = vunpack.c.l.b16 %v451
    %v523 = vunpack.c.l.b16 %v452
    %v524 = vunpack.c.l.b16 %v453
    %v525 = vunpack.c.l.b16 %v454
    %v526 = vunpack.c.l.b16 %v455
    %v527 = vunpack.c.l.b16 %v456
    %v528 = vunpack.c.l.b16 %v457
    %v529 = vunpack.c.l.b16 %v458
    %v530 = vunpack.c.l.b16 %v459
    %v531 = vunpack.c.l.b16 %v460
    %v532 = vunpack.c.l.b16 %v461
    %v533 = vunpack.c.l.b16 %v462
    %v534 = vunpack.c.l.b16 %v463
    %v535 = vunpack.c.l.b16 %v464
    %v536 = vunpack.c.l.b16 %v465
    %v537 = vunpack.c.l.b16 %v466
    %v538 = vunpack.c.l.b16 %v467
    %v539 = vunpack.c.l.b16 %v468
    %v540 = vunpack.c.l.b16 %v469
    %v541 = vunpack.c.l.b16 %v470
    %v542 = vunpack.c.l.b16 %v471
    %v543 = vunpack.c.l.b16 %v472
    %v544 = vpack.c.b16 %v513, %v512
    %v545 = vpack.c.b16 %v515, %v514
    %v546 = vpack.c.b16 %v517, %v516
    %v547 = vpack.c.b16 %v519, %v518
    %v548 = vpack.c.b16 %v521, %v520
    %v549 = vpack.c.b16 %v523, %v522
    %v550 = vpack.c.b16 %v525, %v524
    %v551 = vpack.c.b16 %v527, %v526
    %v552 = vpack.c.b16 %v529, %v528
    %v553 = vpack.c.b16 %v531, %v530
    %v554 = vpack.c.b16 %v533, %v532
    %v555 = vpack.c.b16 %v535, %v534
    %v556 = vpack.c.b16 %v537, %v536
    %v557 = vpack.c.b16 %v539, %v538
    %v558 = vpack.c.b16 %v541, %v540
    %v559 = vpack.c.b16 %v543, %v542
    %576 = vmatprep.subr.bf16.mxu0 0
    %577 = vmatpush1.bf16.msra.mxu0 %v544
    %578 = vmatprep.subr.bf16.mxu0 0
    %579 = vmatpush1.bf16.msra.mxu0 %v545
    %580 = vmatprep.subr.bf16.mxu0 0
    %581 = vmatpush1.bf16.msra.mxu0 %v546
    %582 = vmatprep.subr.bf16.mxu0 0
    %583 = vmatpush1.bf16.msra.mxu0 %v547
    %584 = vmatprep.subr.bf16.mxu0 0
    %585 = vmatpush1.bf16.msra.mxu0 %v548
    %586 = vmatprep.subr.bf16.mxu0 0
    %587 = vmatpush1.bf16.msra.mxu0 %v549
    %588 = vmatprep.subr.bf16.mxu0 0
    %589 = vmatpush1.bf16.msra.mxu0 %v550
    %590 = vmatprep.subr.bf16.mxu0 0
    %591 = vmatpush1.bf16.msra.mxu0 %v551
    %592 = vmatprep.subr.bf16.mxu0 0
    %593 = vmatpush1.bf16.msra.mxu0 %v552
    %594 = vmatprep.subr.bf16.mxu0 0
    %595 = vmatpush1.bf16.msra.mxu0 %v553
    %596 = vmatprep.subr.bf16.mxu0 0
    %597 = vmatpush1.bf16.msra.mxu0 %v554
    %598 = vmatprep.subr.bf16.mxu0 0
    %599 = vmatpush1.bf16.msra.mxu0 %v555
    %600 = vmatprep.subr.bf16.mxu0 0
    %601 = vmatpush1.bf16.msra.mxu0 %v556
    %602 = vmatprep.subr.bf16.mxu0 0
    %603 = vmatpush1.bf16.msra.mxu0 %v557
    %604 = vmatprep.subr.bf16.mxu0 0
    %605 = vmatpush1.bf16.msra.mxu0 %v558
    %606 = vmatprep.subr.bf16.mxu0 0
    %607 = vmatpush1.bf16.msra.mxu0 %v559
    %608 = vmatprep.mubr.bf16.mxu0 %v440
    %609 = vmatmul.mubr.bf16.gmra.mrb[0].mxu0 %v439
    %v610 = vpop.f32.mrb[0].mxu0
    %v611 = vadd.f32 %v478, %v610
    %v612 = vpop.f32.mrb[0].mxu0
    %v613 = vpop.f32.mrb[0].mxu0
    %v614 = vpop.f32.mrb[0].mxu0
    %615 = vdwg.mxu0
    %616 = vst [vmem:[#allocation10] sm:$0xff] %v611
    // Predicated region
    $region46: #{policy_network_forward.1} parent=1 // pred_check
      _
    $region47: #{policy_network_forward.1} parent=1 // pred_check_branch
      %618 = sbr.rel (0) target = $region49
    $region48: #{policy_network_forward.1} parent=1 // pred_region
      %s620 = ssub.s32 128, 128
      %621 = vsyncadd [#allocation4], %s620
      %s623 = sshll.u32 [#allocation10], 4
      %s624 = int_to_ptr.vmem [resolvable:$true] %s623
      %626 = dma.vmem_to_hbm [thread:$0]  %s624, 128, %s7, [#allocation4]
    $region49: #{policy_network_forward.1} parent=1 // pred_fallthru
      _
    // Predicated region
    $region50: #{policy_network_forward.1} parent=1 // pred_check
      _
    $region51: #{policy_network_forward.1} parent=1 // pred_check_branch
      %628 = sbr.rel (0) target = $region53
    $region52: #{policy_network_forward.1} parent=1 // pred_region
      %629 = dma.done [#allocation4], 128
    $region53: #{policy_network_forward.1} parent=1 // pred_fallthru
      _
    %630 = vsyncpa [#allocation3], 1
    %631 = vsyncpa [#allocation6], 1
    %632 = vsyncpa [#allocation9], 1
    %633 = vsyncpa [#allocation4], 1

</llo_original>
